<compile_context>
chip_gen: v7x
topology: tpu7x:2x2x1
jax: 0.10.0
libtpu: 0.0.40
codegen_flags: <defaults>
</compile_context>

<pallas_src>
import functools

import jax
import jax.numpy as jnp
from jax.experimental import pallas as pl
from jax.experimental.pallas import tpu as pltpu

LANES = 128
SUBLANES = 8
NUM_CORES = 2                       # leading "parallel" axis (v7x has 2 TCs)
MAX_BLOCK_BYTES = 2 * 1024 * 1024   # per-input, per-step DMA size target


def _loss_kernel(yp_ref, yt_ref, out_ref, acc_abs, acc_sq, *,
                 alpha, n_elems, rows, tm, steps_per_core, needs_mask):
    c = pl.program_id(0)   # core / parallel axis
    i = pl.program_id(1)   # reduction axis (arbitrary)

    @pl.when(i == 0)
    def _():
        acc_abs[...] = jnp.zeros_like(acc_abs)
        acc_sq[...] = jnp.zeros_like(acc_sq)

    d = yp_ref[...].astype(jnp.float32) - yt_ref[...].astype(jnp.float32)

    def accumulate(dv):
        # Fold tm rows into a single vreg-shaped (8, 128) accumulator:
        # leading-axis reduce = pure VPU vreg adds, no XLU, no big VMEM stores.
        acc_abs[...] += jnp.sum(
            jnp.abs(dv).reshape(tm // SUBLANES, SUBLANES, LANES), axis=0)
        acc_sq[...] += jnp.sum(
            (dv * dv).reshape(tm // SUBLANES, SUBLANES, LANES), axis=0)

    if needs_mask:
        t = c * steps_per_core + i            # global row-tile index
        tile_is_partial = (t + 1) * tm > rows  # scalar; true for <=1 tile/core

        @pl.when(jnp.logical_not(tile_is_partial))
        def _():
            accumulate(d)                      # minimal hot loop (no mask ops)

        @pl.when(tile_is_partial)
        def _():
            # Select (NOT multiply: Pallas-padded rows may hold NaN garbage)
            # rows past the logical end.  Covers both the padded partial last
            # tile and the clamped duplicate tile on the second core.  Lane
            # tail needs no mask: wrapper zero-padded both inputs there.
            grow = t * tm + jax.lax.broadcasted_iota(jnp.int32, (tm, LANES), 0)
            accumulate(jnp.where(grow < rows, d, 0.0))
    else:
        accumulate(d)

    @pl.when(i == pl.num_programs(1) - 1)
    def _():
        # Per-core partial of the final loss as a lane-dense (8,128) slab;
        # the tiny cross-lane / cross-core reduction happens in the wrapper.
        inv_n = 1.0 / float(n_elems)
        out_ref[0] = (alpha * acc_abs[...]
                      + (1.0 - alpha) * acc_sq[...]) * inv_n


def custom_loss(y_pred, y_true, alpha, *, _max_block_bytes=MAX_BLOCK_BYTES):
    assert y_pred.shape == y_true.shape
    n_elems = int(y_pred.size)
    itemsize = jnp.dtype(y_pred.dtype).itemsize

    # Flatten in native dtype; only a <128-element zero pad when the element
    # count is not lane aligned (pads are zero in BOTH inputs, so they
    # contribute nothing to either sum and need no in-kernel mask).
    yp = y_pred.reshape(-1)
    yt = y_true.reshape(-1)
    rem = n_elems % LANES
    if rem != 0:
        pad = LANES - rem
        yp = jnp.pad(yp, (0, pad))
        yt = jnp.pad(yt, (0, pad))
    rows = yp.size // LANES
    yp = yp.reshape(rows, LANES)
    yt = yt.reshape(rows, LANES)

    # Constant-byte row tiles so per-step overhead stays amortized for any
    # dtype, rounded to the dtype's packed-sublane multiple.
    sub = SUBLANES * max(1, 4 // itemsize)          # 8 f32, 16 bf16, 32 int8
    max_tm = max(sub, (_max_block_bytes // (LANES * itemsize)) // sub * sub)
    tm = min(max_tm, ((rows + sub - 1) // sub) * sub)

    n_tiles = pl.cdiv(rows, tm)
    steps_per_core = pl.cdiv(n_tiles, NUM_CORES)
    needs_mask = (rows % tm != 0) or (NUM_CORES * steps_per_core != n_tiles)

    def in_map(c, i):
        # Clamp so the duplicate tile on the last core (odd tile count) stays
        # in bounds; it is fully masked out inside the kernel.
        return (jnp.minimum(c * steps_per_core + i, n_tiles - 1), 0)

    kernel = functools.partial(
        _loss_kernel, alpha=float(alpha), n_elems=n_elems, rows=rows, tm=tm,
        steps_per_core=steps_per_core, needs_mask=needs_mask)

    out = pl.pallas_call(
        kernel,
        out_shape=jax.ShapeDtypeStruct((NUM_CORES, SUBLANES, LANES),
                                       jnp.float32),
        grid_spec=pltpu.PrefetchScalarGridSpec(
            num_scalar_prefetch=0,
            grid=(NUM_CORES, steps_per_core),
            in_specs=[
                pl.BlockSpec((tm, LANES), in_map),
                pl.BlockSpec((tm, LANES), in_map),
            ],
            out_specs=pl.BlockSpec((1, SUBLANES, LANES),
                                   lambda c, i: (c, 0, 0)),
            scratch_shapes=[
                pltpu.VMEM((SUBLANES, LANES), jnp.float32),
                pltpu.VMEM((SUBLANES, LANES), jnp.float32),
            ],
        ),
        compiler_params=pltpu.CompilerParams(
            dimension_semantics=("parallel", "arbitrary"),
            vmem_limit_bytes=32 * 1024 * 1024,
        ),
        cost_estimate=pl.CostEstimate(
            flops=5 * n_elems,
            transcendentals=0,
            bytes_accessed=2 * n_elems * itemsize,
        ),
    )(yp, yt)
    return jnp.sum(out)


def _reference(y_pred, y_true, alpha):
    d = y_pred.astype(jnp.float32) - y_true.astype(jnp.float32)
    return alpha * jnp.mean(jnp.abs(d)) + (1.0 - alpha) * jnp.mean(d * d)


if __name__ == "__main__":
    alpha = 0.3
    key = jax.random.PRNGKey(0)
    k1, k2, k3, k4 = jax.random.split(key, 4)

    # Main case: NCHW prediction/target pair (lane-aligned element count).
    y_pred = jax.random.normal(k1, (2, 4, 16, 16), dtype=jnp.float32)
    y_true = jax.random.normal(k2, (2, 4, 16, 16), dtype=jnp.float32)
    loss = jax.block_until_ready(custom_loss(y_pred, y_true, alpha))
    ref = _reference(y_pred, y_true, alpha)
    assert jnp.allclose(loss, ref, rtol=1e-5, atol=1e-6), (loss, ref)

    # Ragged case: exercises the in-kernel partial-tile mask (105 elements).
    yp_r = jax.random.normal(k3, (3, 5, 7), dtype=jnp.float32)
    yt_r = jax.random.normal(k4, (3, 5, 7), dtype=jnp.float32)
    loss_r = jax.block_until_ready(custom_loss(yp_r, yt_r, alpha))
    ref_r = _reference(yp_r, yt_r, alpha)
    assert jnp.allclose(loss_r, ref_r, rtol=1e-5, atol=1e-6), (loss_r, ref_r)

    # Multi-tile case: tiny forced tile so both cores get real (unmasked)
    # work and the 2-way partial-sum path is exercised at small shapes.
    loss_m = jax.block_until_ready(
        custom_loss(y_pred, y_true, alpha, _max_block_bytes=4096))
    assert jnp.allclose(loss_m, ref, rtol=1e-5, atol=1e-6), (loss_m, ref)

    print("KERNEL_OK")
</pallas_src>

<mosaic_0001>
module attributes {stable_mosaic.version = 11 : i64} {
  func.func @_loss_kernel(%arg0: i32, %arg1: i32, %arg2: memref<16x128xf32, #tpu.memory_space<vmem>>, %arg3: memref<16x128xf32, #tpu.memory_space<vmem>>, %arg4: memref<1x8x128xf32, #tpu.memory_space<vmem>>, %arg5: memref<8x128xf32, #tpu.memory_space<vmem>>, %arg6: memref<8x128xf32, #tpu.memory_space<vmem>>) attributes {dimension_semantics = [#tpu.dimension_semantics<parallel>, #tpu.dimension_semantics<arbitrary>], iteration_bounds = array<i64: 2, 1>, scalar_prefetch = 0 : i64, scratch_operands = 2 : i64, tpu.core_type = #tpu.core_type<tc>, window_params = [{transform_indices = @transform_0, window_bounds = array<i64: 16, 128>}, {transform_indices = @transform_1, window_bounds = array<i64: 16, 128>}, {transform_indices = @transform_2, window_bounds = array<i64: 1, 8, 128>}]} {
    %c0_i32 = arith.constant 0 : i32
    %0 = arith.cmpi eq, %arg1, %c0_i32 : i32
    %1 = arith.extui %0 : i1 to i32
    %c0_i32_0 = arith.constant 0 : i32
    %2 = arith.cmpi ne, %1, %c0_i32_0 : i32
    scf.if %2 {
      %cst = arith.constant 0.000000e+00 : f32
      %19 = vector.broadcast %cst : f32 to vector<8x128xf32>
      %c0_10 = arith.constant 0 : index
      %c0_11 = arith.constant 0 : index
      %20 = vector.load %arg5[%c0_10, %c0_11] : memref<8x128xf32, #tpu.memory_space<vmem>>, vector<8x128xf32>
      tpu.vector_store %arg5[%c0_10, %c0_11], %19 {strides = array<i32>} : memref<8x128xf32, #tpu.memory_space<vmem>>, vector<8x128xf32>,
      %cst_12 = arith.constant 0.000000e+00 : f32
      %21 = vector.broadcast %cst_12 : f32 to vector<8x128xf32>
      %c0_13 = arith.constant 0 : index
      %c0_14 = arith.constant 0 : index
      %22 = vector.load %arg6[%c0_13, %c0_14] : memref<8x128xf32, #tpu.memory_space<vmem>>, vector<8x128xf32>
      tpu.vector_store %arg6[%c0_13, %c0_14], %21 {strides = array<i32>} : memref<8x128xf32, #tpu.memory_space<vmem>>, vector<8x128xf32>,
    } else {
    }
    %c0 = arith.constant 0 : index
    %c0_1 = arith.constant 0 : index
    %3 = vector.load %arg2[%c0, %c0_1] : memref<16x128xf32, #tpu.memory_space<vmem>>, vector<16x128xf32>
    %c0_2 = arith.constant 0 : index
    %c0_3 = arith.constant 0 : index
    %4 = vector.load %arg3[%c0_2, %c0_3] : memref<16x128xf32, #tpu.memory_space<vmem>>, vector<16x128xf32>
    %5 = arith.subf %3, %4 : vector<16x128xf32>
    %c1_i32 = arith.constant 1 : i32
    %6 = arith.muli %arg0, %c1_i32 : i32
    %7 = arith.addi %6, %arg1 : i32
    %c1_i32_4 = arith.constant 1 : i32
    %8 = arith.addi %7, %c1_i32_4 : i32
    %c16_i32 = arith.constant 16 : i32
    %9 = arith.muli %8, %c16_i32 : i32
    %c16_i32_5 = arith.constant 16 : i32
    %10 = arith.cmpi sgt, %9, %c16_i32_5 : i32
    %true = arith.constant true
    %11 = arith.xori %10, %true : i1
    %12 = arith.extui %11 : i1 to i32
    %c0_i32_6 = arith.constant 0 : i32
    %13 = arith.cmpi ne, %12, %c0_i32_6 : i32
    scf.if %13 {
      %c0_10 = arith.constant 0 : index
      %c0_11 = arith.constant 0 : index
      %19 = vector.load %arg5[%c0_10, %c0_11] : memref<8x128xf32, #tpu.memory_space<vmem>>, vector<8x128xf32>
      %20 = math.absf %5 : vector<16x128xf32>
      %21 = vector.shape_cast %20 : vector<16x128xf32> to vector<2x8x128xf32>
      %cst = arith.constant dense<0.000000e+00> : vector<8x128xf32>
      %22 = vector.multi_reduction <add>, %21, %cst [0] : vector<2x8x128xf32> to vector<8x128xf32>
      %23 = arith.addf %19, %22 : vector<8x128xf32>
      %c0_12 = arith.constant 0 : index
      %c0_13 = arith.constant 0 : index
      %24 = vector.load %arg5[%c0_12, %c0_13] : memref<8x128xf32, #tpu.memory_space<vmem>>, vector<8x128xf32>
      tpu.vector_store %arg5[%c0_12, %c0_13], %23 {strides = array<i32>} : memref<8x128xf32, #tpu.memory_space<vmem>>, vector<8x128xf32>,
      %c0_14 = arith.constant 0 : index
      %c0_15 = arith.constant 0 : index
      %25 = vector.load %arg6[%c0_14, %c0_15] : memref<8x128xf32, #tpu.memory_space<vmem>>, vector<8x128xf32>
      %26 = arith.mulf %5, %5 : vector<16x128xf32>
      %27 = vector.shape_cast %26 : vector<16x128xf32> to vector<2x8x128xf32>
      %cst_16 = arith.constant dense<0.000000e+00> : vector<8x128xf32>
      %28 = vector.multi_reduction <add>, %27, %cst_16 [0] : vector<2x8x128xf32> to vector<8x128xf32>
      %29 = arith.addf %25, %28 : vector<8x128xf32>
      %c0_17 = arith.constant 0 : index
      %c0_18 = arith.constant 0 : index
      %30 = vector.load %arg6[%c0_17, %c0_18] : memref<8x128xf32, #tpu.memory_space<vmem>>, vector<8x128xf32>
      tpu.vector_store %arg6[%c0_17, %c0_18], %29 {strides = array<i32>} : memref<8x128xf32, #tpu.memory_space<vmem>>, vector<8x128xf32>,
    } else {
    }
    %14 = arith.extui %10 : i1 to i32
    %c0_i32_7 = arith.constant 0 : i32
    %15 = arith.cmpi ne, %14, %c0_i32_7 : i32
    scf.if %15 {
      %c16_i32_10 = arith.constant 16 : i32
      %19 = arith.muli %7, %c16_i32_10 : i32
      %20 = tpu.iota {dimensions = array<i32: 0>} : vector<16x128xi32>
      %21 = vector.broadcast %19 : i32 to vector<16x128xi32>
      %22 = arith.addi %21, %20 : vector<16x128xi32>
      %c16_i32_11 = arith.constant 16 : i32
      %23 = vector.broadcast %c16_i32_11 : i32 to vector<16x128xi32>
      %24 = arith.cmpi slt, %22, %23 : vector<16x128xi32>
      %cst = arith.constant 0.000000e+00 : f32
      %25 = vector.broadcast %cst : f32 to vector<16x128xf32>
      %26 = arith.select %24, %5, %25 : vector<16x128xi1>, vector<16x128xf32>
      %c0_12 = arith.constant 0 : index
      %c0_13 = arith.constant 0 : index
      %27 = vector.load %arg5[%c0_12, %c0_13] : memref<8x128xf32, #tpu.memory_space<vmem>>, vector<8x128xf32>
      %28 = math.absf %26 : vector<16x128xf32>
      %29 = vector.shape_cast %28 : vector<16x128xf32> to vector<2x8x128xf32>
      %cst_14 = arith.constant dense<0.000000e+00> : vector<8x128xf32>
      %30 = vector.multi_reduction <add>, %29, %cst_14 [0] : vector<2x8x128xf32> to vector<8x128xf32>
      %31 = arith.addf %27, %30 : vector<8x128xf32>
      %c0_15 = arith.constant 0 : index
      %c0_16 = arith.constant 0 : index
      %32 = vector.load %arg5[%c0_15, %c0_16] : memref<8x128xf32, #tpu.memory_space<vmem>>, vector<8x128xf32>
      tpu.vector_store %arg5[%c0_15, %c0_16], %31 {strides = array<i32>} : memref<8x128xf32, #tpu.memory_space<vmem>>, vector<8x128xf32>,
      %c0_17 = arith.constant 0 : index
      %c0_18 = arith.constant 0 : index
      %33 = vector.load %arg6[%c0_17, %c0_18] : memref<8x128xf32, #tpu.memory_space<vmem>>, vector<8x128xf32>
      %34 = arith.mulf %26, %26 : vector<16x128xf32>
      %35 = vector.shape_cast %34 : vector<16x128xf32> to vector<2x8x128xf32>
      %cst_19 = arith.constant dense<0.000000e+00> : vector<8x128xf32>
      %36 = vector.multi_reduction <add>, %35, %cst_19 [0] : vector<2x8x128xf32> to vector<8x128xf32>
      %37 = arith.addf %33, %36 : vector<8x128xf32>
      %c0_20 = arith.constant 0 : index
      %c0_21 = arith.constant 0 : index
      %38 = vector.load %arg6[%c0_20, %c0_21] : memref<8x128xf32, #tpu.memory_space<vmem>>, vector<8x128xf32>
      tpu.vector_store %arg6[%c0_20, %c0_21], %37 {strides = array<i32>} : memref<8x128xf32, #tpu.memory_space<vmem>>, vector<8x128xf32>,
    } else {
    }
    %c0_i32_8 = arith.constant 0 : i32
    %16 = arith.cmpi eq, %arg1, %c0_i32_8 : i32
    %17 = arith.extui %16 : i1 to i32
    %c0_i32_9 = arith.constant 0 : i32
    %18 = arith.cmpi ne, %17, %c0_i32_9 : i32
    scf.if %18 {
      %c0_10 = arith.constant 0 : index
      %c0_11 = arith.constant 0 : index
      %19 = vector.load %arg5[%c0_10, %c0_11] : memref<8x128xf32, #tpu.memory_space<vmem>>, vector<8x128xf32>
      %cst = arith.constant 3.000000e-01 : f32
      %20 = vector.broadcast %cst : f32 to vector<8x128xf32>
      %21 = arith.mulf %20, %19 : vector<8x128xf32>
      %c0_12 = arith.constant 0 : index
      %c0_13 = arith.constant 0 : index
      %22 = vector.load %arg6[%c0_12, %c0_13] : memref<8x128xf32, #tpu.memory_space<vmem>>, vector<8x128xf32>
      %cst_14 = arith.constant 0.699999988 : f32
      %23 = vector.broadcast %cst_14 : f32 to vector<8x128xf32>
      %24 = arith.mulf %23, %22 : vector<8x128xf32>
      %25 = arith.addf %21, %24 : vector<8x128xf32>
      %cst_15 = arith.constant 4.8828125E-4 : f32
      %26 = vector.broadcast %cst_15 : f32 to vector<8x128xf32>
      %27 = arith.mulf %25, %26 : vector<8x128xf32>
      %c0_16 = arith.constant 0 : index
      %c0_17 = arith.constant 0 : index
      %c0_18 = arith.constant 0 : index
      %28 = vector.load %arg4[%c0_16, %c0_17, %c0_18] : memref<1x8x128xf32, #tpu.memory_space<vmem>>, vector<1x8x128xf32>
      %29 = vector.shape_cast %28 : vector<1x8x128xf32> to vector<8x128xf32>
      %30 = vector.shape_cast %27 : vector<8x128xf32> to vector<1x8x128xf32>
      tpu.vector_store %arg4[%c0_16, %c0_17, %c0_18], %30 {strides = array<i32>} : memref<1x8x128xf32, #tpu.memory_space<vmem>>, vector<1x8x128xf32>,
    } else {
    }
    return
  }
  func.func @transform_0(%arg0: i32, %arg1: i32) -> (i32, i32) {
    %c1_i32 = arith.constant 1 : i32
    %0 = arith.muli %arg0, %c1_i32 : i32
    %1 = arith.addi %0, %arg1 : i32
    %c0_i32 = arith.constant 0 : i32
    %2 = arith.minsi %1, %c0_i32 : i32
    %c0_i32_0 = arith.constant 0 : i32
    %c0_i32_1 = arith.constant 0 : i32
    return %2, %c0_i32_0 : i32, i32
  }
  func.func @transform_1(%arg0: i32, %arg1: i32) -> (i32, i32) {
    %c1_i32 = arith.constant 1 : i32
    %0 = arith.muli %arg0, %c1_i32 : i32
    %1 = arith.addi %0, %arg1 : i32
    %c0_i32 = arith.constant 0 : i32
    %2 = arith.minsi %1, %c0_i32 : i32
    %c0_i32_0 = arith.constant 0 : i32
    %c0_i32_1 = arith.constant 0 : i32
    return %2, %c0_i32_0 : i32, i32
  }
  func.func @transform_2(%arg0: i32, %arg1: i32) -> (i32, i32, i32) {
    %c0_i32 = arith.constant 0 : i32
    %c0_i32_0 = arith.constant 0 : i32
    %c0_i32_1 = arith.constant 0 : i32
    return %arg0, %c0_i32, %c0_i32_0 : i32, i32, i32
  }
}

</mosaic_0001>

<llo_original>
// kernel: tpu_custom_call.1
$region0: #{tpu_custom_call.1}
  #allocation0 [shape = 'u32[]', space=smem, size = 0x4, offset = 0x4, fixed_abs, tag = 'smem constant byte address 0x4 - core index']
  #allocation1 [shape = 'u32[144,128]{1,0:T(1,128)}', space=vmem, size = 0x12000, scoped, tag = 'internal scratch']
  #allocation2 [shape = 'f32[8,128]{1,0:T(8,128)}', space=vmem, size = 0x1000, scoped, tag = 'scratch operand']
  #allocation3 [shape = 'f32[8,128]{1,0:T(8,128)}', space=vmem, size = 0x1000, scoped, tag = 'scratch operand']
  %s0 = inlined_call_operand.hbm [shape: f32[16,128], index: 0, kind: input, shape index: {}]
  %s1 = inlined_call_operand.hbm [shape: f32[16,128], index: 1, kind: input, shape index: {}]
  %s2 = inlined_call_operand.hbm [shape: f32[2,8,128], index: 2, kind: output, shape index: {}]
  %s3 = sld [smem:[#allocation0]]
  $region65: #{tpu_custom_call.1} parent=0
    _
  %s5 = ssub.s32 1, %s3
  %s6 = scalar_select 0, %s5, %s3
  $region1: #{tpu_custom_call.1} parent=0
    #allocation4 [shape = 'u8[16384]{0}', space=vmem, size = 0x4000, scoped, tag = 'input window, operand 0']
    #allocation5 [shape = 's32[2]{0}', space=sflag, size = 0x8, scoped, tag = 'scoped memory for tpu_custom_call.1']
    #allocation6 [shape = 's32[2]{0}', space=sflag, size = 0x8, scoped, tag = 'scoped memory for tpu_custom_call.1']
    #allocation7 [shape = 'u8[16384]{0}', space=vmem, size = 0x4000, scoped, tag = 'input window, operand 1']
    #allocation8 [shape = 's32[2]{0}', space=sflag, size = 0x8, scoped, tag = 'scoped memory for tpu_custom_call.1']
    #allocation9 [shape = 'u8[8192]{0}', space=vmem, size = 0x2000, scoped, tag = 'output window, operand 0']
    %7 = vsyncpa [#allocation5], 0
    %s8 = scalar_lea.sflag [#allocation5], 1
    %9 = vsyncpa %s8, 0
    %10 = vsyncpa [#allocation8], 0
    %s11 = scalar_lea.sflag [#allocation8], 1
    %12 = vsyncpa %s11, 0
    %13 = vsyncpa [#allocation6], 0
    %s14 = scalar_lea.sflag [#allocation6], 1
    %15 = vsyncpa %s14, 0
    loop: start=0, step=1, limit=4
    $region2: #{tpu_custom_call.1} parent=1 // loop_pre_header
      _
    $region3: #{tpu_custom_call.1} parent=1 // loop_header
      %s17 = sphi 0, %s21
      %p18 = scmp.ge.s32.totalorder %s17, 4
      %s24 = sphi 0, %s36
      %s25 = sphi 0, %s32
      %s26 = sphi 0, %s24
      %s27 = sphi 0, %s25
      %s28 = sphi 0, %s26
      %s29 = sphi 0, %s27
      %s45 = sphi 0, %s47
      %s48 = sphi 0, %s45
      %s49 = sphi 0, %s48
      %s65 = sphi 0, %s49
      %s77 = sphi 0, %s79
      %s80 = sphi 0, %s77
      %s81 = sphi 0, %s80
      %s97 = sphi 0, %s81
      %s103 = sphi 0, %s105
      %s106 = sphi 0, %s103
      %s107 = sphi 0, %s106
      %s123 = sphi 0, %s107
    $region4: #{tpu_custom_call.1} parent=1 // loop_header_branch
      %20 = sbr.rel (%p18) target = $region8
    $region5: #{tpu_custom_call.1} parent=1 // loop_body
      %s22 = ssub.s32 %s17, 1
      %s23 = ssub.s32 %s17, 2
      %s30 = sadd.s32 1, %s25
      %p31 = scmp.ge.s32.totalorder %s30, 1
      %s32 = scalar_select %p31, 0, %s30
      %s33 = sadd.s32 1, %s24
      %s34 = scalar_select %p31, %s33, %s24
      %p35 = scmp.ge.s32.totalorder %s34, 2
      %s36 = scalar_select %p35, 0, %s34
      %s37 = sadd.s32 %s24, %s25
      %p38 = scmp.lt.s32.totalorder %s37, 0
      %s39 = scalar_select %p38, %s37, 0
      %s40 = sadd.s32 %s36, %s32
      %p41 = scmp.lt.s32.totalorder %s40, 0
      %s42 = scalar_select %p41, %s40, 0
      %s43 = ssub.s32 %s39, %s42
      %p44 = scmp.eq.s32.totalorder %s43, 0
      %s46 = sadd.s32 %s45, 1
      %s47 = scalar_select %p44, %s45, %s46
      %p50 = pneg %p44
      %p51 = scmp.eq.s32.totalorder %s17, 1
      %p52 = por %p50, %p51
      %p53 = scmp.ne.s32.totalorder %s45, %s48
      %p54 = scmp.eq.s32.totalorder %s17, 0
      %p55 = por %p53, %p54
      %p56 = scmp.ne.s32.totalorder %s45, %s48
      %p57 = scmp.eq.s32.totalorder %s22, 1
      %p58 = por %p56, %p57
      %p59 = scmp.ne.s32.totalorder %s48, %s49
      %p60 = scmp.eq.s32.totalorder %s22, 0
      %p61 = por %p59, %p60
      %p62 = scmp.ne.s32.totalorder %s48, %s49
      %p63 = scmp.eq.s32.totalorder %s23, 1
      %p64 = por %p62, %p63
      %p66 = scmp.ne.s32.totalorder %s49, %s65
      %p67 = scmp.eq.s32.totalorder %s23, 0
      %p68 = por %p66, %p67
      %s69 = sadd.s32 %s24, %s25
      %p70 = scmp.lt.s32.totalorder %s69, 0
      %s71 = scalar_select %p70, %s69, 0
      %s72 = sadd.s32 %s36, %s32
      %p73 = scmp.lt.s32.totalorder %s72, 0
      %s74 = scalar_select %p73, %s72, 0
      %s75 = ssub.s32 %s71, %s74
      %p76 = scmp.eq.s32.totalorder %s75, 0
      %s78 = sadd.s32 %s77, 1
      %s79 = scalar_select %p76, %s77, %s78
      %p82 = pneg %p76
      %p83 = scmp.eq.s32.totalorder %s17, 1
      %p84 = por %p82, %p83
      %p85 = scmp.ne.s32.totalorder %s77, %s80
      %p86 = scmp.eq.s32.totalorder %s17, 0
      %p87 = por %p85, %p86
      %p88 = scmp.ne.s32.totalorder %s77, %s80
      %p89 = scmp.eq.s32.totalorder %s22, 1
      %p90 = por %p88, %p89
      %p91 = scmp.ne.s32.totalorder %s80, %s81
      %p92 = scmp.eq.s32.totalorder %s22, 0
      %p93 = por %p91, %p92
      %p94 = scmp.ne.s32.totalorder %s80, %s81
      %p95 = scmp.eq.s32.totalorder %s23, 1
      %p96 = por %p94, %p95
      %p98 = scmp.ne.s32.totalorder %s81, %s97
      %p99 = scmp.eq.s32.totalorder %s23, 0
      %p100 = por %p98, %p99
      %s101 = ssub.s32 %s24, %s36
      %p102 = scmp.eq.s32.totalorder %s101, 0
      %s104 = sadd.s32 %s103, 1
      %s105 = scalar_select %p102, %s103, %s104
      %p108 = pneg %p102
      %p109 = scmp.eq.s32.totalorder %s17, 1
      %p110 = por %p108, %p109
      %p111 = scmp.ne.s32.totalorder %s103, %s106
      %p112 = scmp.eq.s32.totalorder %s17, 0
      %p113 = por %p111, %p112
      %p114 = scmp.ne.s32.totalorder %s103, %s106
      %p115 = scmp.eq.s32.totalorder %s22, 1
      %p116 = por %p114, %p115
      %p117 = scmp.ne.s32.totalorder %s106, %s107
      %p118 = scmp.eq.s32.totalorder %s22, 0
      %p119 = por %p117, %p118
      %p120 = scmp.ne.s32.totalorder %s106, %s107
      %p121 = scmp.eq.s32.totalorder %s23, 1
      %p122 = por %p120, %p121
      %p124 = scmp.ne.s32.totalorder %s107, %s123
      %p125 = scmp.eq.s32.totalorder %s23, 0
      %p126 = por %p124, %p125
      %p127 = scmp.le.s32.totalorder 1, %s17
      %p128 = scmp.lt.s32.totalorder %s17, 3
      %p129 = pnand %p127, %p128
      %p130 = pneg %p129
      // Predicated region
      $region9: #{tpu_custom_call.1} parent=5 // pred_check
        _
      $region10: #{tpu_custom_call.1} parent=5 // pred_check_branch
        %132 = sbr.rel (%p129) target = $region12
      $region11: #{tpu_custom_call.1} parent=5 // pred_region
        %s133 = ssub.s32 %s17, 1
      $region12: #{tpu_custom_call.1} parent=5 // pred_fallthru
        _
      %p134 = scmp.lt.s32.totalorder %s17, 2
      // Predicated region
      $region13: #{tpu_custom_call.1} parent=5 // pred_check
        %p135 = pneg %p134
      $region14: #{tpu_custom_call.1} parent=5 // pred_check_branch
        %137 = sbr.rel (%p135) target = $region16
      $region15: #{tpu_custom_call.1} parent=5 // pred_region
        // Predicated region
        $region17: #{tpu_custom_call.1} parent=15 // pred_check
          %p138 = pneg %p55
        $region18: #{tpu_custom_call.1} parent=15 // pred_check_branch
          %140 = sbr.rel (%p138) target = $region20
        $region19: #{tpu_custom_call.1} parent=15 // pred_region
          %s141 = sand.u32 %s45, 1
          %s142 = scalar_lea.sflag [#allocation5], %s141
          %s143 = sand.u32 %s45, 1
          %s144 = smul.addr %s143, 16
          %s145 = scalar_lea.vmem [#allocation4], %s144
          %s146 = sadd.s32 %s24, %s25
          %p147 = scmp.lt.s32.totalorder %s146, 0
          %s148 = scalar_select %p147, %s146, 0
          %s149 = smul.u32 2, %s148
          %s151 = ssub.s32 256, 256
          %152 = vsyncadd %s142, %s151
          %s153 = smul.addr %s149, 128
          %s154 = scalar_lea.hbm %s0, %s153
          %s155 = sshll.u32 %s145, 4
          %s156 = int_to_ptr.vmem [resolvable:$true] %s155
          %161 = dma.hbm_to_vmem [thread:$0]  %s154, 256, %s156, %s142, 128, 128, 8
        $region20: #{tpu_custom_call.1} parent=15 // pred_fallthru
          _
        // Predicated region
        $region21: #{tpu_custom_call.1} parent=15 // pred_check
          %p162 = pneg %p87
        $region22: #{tpu_custom_call.1} parent=15 // pred_check_branch
          %164 = sbr.rel (%p162) target = $region24
        $region23: #{tpu_custom_call.1} parent=15 // pred_region
          %s165 = sand.u32 %s77, 1
          %s166 = scalar_lea.sflag [#allocation8], %s165
          %s167 = sand.u32 %s77, 1
          %s168 = smul.addr %s167, 16
          %s169 = scalar_lea.vmem [#allocation7], %s168
          %s170 = sadd.s32 %s24, %s25
          %p171 = scmp.lt.s32.totalorder %s170, 0
          %s172 = scalar_select %p171, %s170, 0
          %s173 = smul.u32 2, %s172
          %s175 = ssub.s32 256, 256
          %176 = vsyncadd %s166, %s175
          %s177 = smul.addr %s173, 128
          %s178 = scalar_lea.hbm %s1, %s177
          %s179 = sshll.u32 %s169, 4
          %s180 = int_to_ptr.vmem [resolvable:$true] %s179
          %185 = dma.hbm_to_vmem [thread:$0]  %s178, 256, %s180, %s166, 128, 128, 8
        $region24: #{tpu_custom_call.1} parent=15 // pred_fallthru
          _
      $region16: #{tpu_custom_call.1} parent=5 // pred_fallthru
        _
      %p186 = scmp.le.s32.totalorder 1, %s17
      %p187 = scmp.lt.s32.totalorder %s17, 3
      %p188 = pnand %p186, %p187
      %p189 = pneg %p188
      // Predicated region
      $region25: #{tpu_custom_call.1} parent=5 // pred_check
        _
      $region26: #{tpu_custom_call.1} parent=5 // pred_check_branch
        %191 = sbr.rel (%p188) target = $region28
      $region27: #{tpu_custom_call.1} parent=5 // pred_region
        %s192 = ssub.s32 %s17, 1
        %s193 = sand.u32 %s48, 1
        %s194 = scalar_lea.sflag [#allocation5], %s193
        %s195 = sand.u32 %s48, 1
        %s196 = smul.addr %s195, 16
        %s197 = scalar_lea.vmem [#allocation4], %s196
        // Predicated region
        $region29: #{tpu_custom_call.1} parent=27 // pred_check
          %p198 = pneg %p61
        $region30: #{tpu_custom_call.1} parent=27 // pred_check_branch
          %200 = sbr.rel (%p198) target = $region32
        $region31: #{tpu_custom_call.1} parent=27 // pred_region
          %201 = dma.done %s194, 256
        $region32: #{tpu_custom_call.1} parent=27 // pred_fallthru
          _
        %s202 = sand.u32 %s80, 1
        %s203 = scalar_lea.sflag [#allocation8], %s202
        %s204 = sand.u32 %s80, 1
        %s205 = smul.addr %s204, 16
        %s206 = scalar_lea.vmem [#allocation7], %s205
        // Predicated region
        $region33: #{tpu_custom_call.1} parent=27 // pred_check
          %p207 = pneg %p93
        $region34: #{tpu_custom_call.1} parent=27 // pred_check_branch
          %209 = sbr.rel (%p207) target = $region36
        $region35: #{tpu_custom_call.1} parent=27 // pred_region
          %210 = dma.done %s203, 256
        $region36: #{tpu_custom_call.1} parent=27 // pred_fallthru
          _
        %s211 = sand.u32 %s48, 1
        %s212 = scalar_lea.sflag [#allocation5], %s211
        %s213 = sand.u32 %s48, 1
        %s214 = smul.addr %s213, 16
        %s215 = scalar_lea.vmem [#allocation4], %s214
        %p216 = pneg %p61
        %p217 = pneg %p58
        %s218 = sand.u32 %s80, 1
        %s219 = scalar_lea.sflag [#allocation8], %s218
        %s220 = sand.u32 %s80, 1
        %s221 = smul.addr %s220, 16
        %s222 = scalar_lea.vmem [#allocation7], %s221
        %p223 = pneg %p93
        %p224 = pneg %p90
        %p225 = pneg %p119
        %p226 = pneg %p116
        %s227 = sand.u32 %s106, 1
        %s228 = scalar_lea.sflag [#allocation6], %s227
        %s229 = sand.u32 %s106, 1
        %s230 = smul.addr %s229, 8
        %s231 = scalar_lea.vmem [#allocation9], %s230
        %s232 = sadd.s32 %s26, %s27
        %p233 = scmp.lt.s32.totalorder %s232, 0
        %s234 = scalar_select %p233, %s232, 0
        %s235 = smul.u32 2, %s234
        %s236 = sadd.s32 %s26, %s27
        %p237 = scmp.lt.s32.totalorder %s236, 0
        %s238 = scalar_select %p237, %s236, 0
        %s239 = smul.u32 2, %s238
        %p240 = scmp.eq.s32.totalorder %s27, 0
        // Predicated region
        $region37: #{tpu_custom_call.1} parent=27 // pred_check
          %p241 = pneg %p240
        $region38: #{tpu_custom_call.1} parent=27 // pred_check_branch
          %243 = sbr.rel (%p241) target = $region40
        $region39: #{tpu_custom_call.1} parent=27 // pred_region
          %244 = vst [vmem:[#allocation2] sm:$0xff] 0.0
          %245 = vst [vmem:[#allocation3] sm:$0xff] 0.0
        $region40: #{tpu_custom_call.1} parent=27 // pred_fallthru
          _
        %v246 = vld [vmem:[%s197] sm:$0xff]
        %v247 = vld [vmem:[%s197 + $0x8] sm:$0xff]
        %v248 = vld [vmem:[%s206] sm:$0xff]
        %v249 = vld [vmem:[%s206 + $0x8] sm:$0xff]
        %v250 = vsub.f32 %v246, %v248
        %v251 = vsub.f32 %v247, %v249
        %s252 = sadd.s32 %s26, %s27
        %s253 = sadd.s32 %s252, 1
        %s254 = smul.u32 %s253, 16
        %p255 = scmp.gt.s32.totalorder %s254, 16
        %p256 = scmp.le.s32.totalorder %s254, 16
        // Predicated region
        $region41: #{tpu_custom_call.1} parent=27 // pred_check
          %p257 = pneg %p256
        $region42: #{tpu_custom_call.1} parent=27 // pred_check_branch
          %259 = sbr.rel (%p257) target = $region44
        $region43: #{tpu_custom_call.1} parent=27 // pred_region
          %v260 = vld [vmem:[#allocation2] sm:$0xff]
          %v261 = vand.u32 2147483647, %v250
          %v262 = vand.u32 2147483647, %v251
          %v263 = vadd.f32 %v261, %v262
          %v264 = vadd.f32 %v260, %v263
          %265 = vst [vmem:[#allocation2] sm:$0xff] %v264
          %v266 = vld [vmem:[#allocation3] sm:$0xff]
          %v267 = vmul.f32 %v250, %v250
          %v268 = vmul.f32 %v251, %v251
          %v269 = vadd.f32 %v267, %v268
          %v270 = vadd.f32 %v266, %v269
          %271 = vst [vmem:[#allocation3] sm:$0xff] %v270
        $region44: #{tpu_custom_call.1} parent=27 // pred_fallthru
          _
        // Predicated region
        $region45: #{tpu_custom_call.1} parent=27 // pred_check
          %p272 = pneg %p255
        $region46: #{tpu_custom_call.1} parent=27 // pred_check_branch
          %274 = sbr.rel (%p272) target = $region48
        $region47: #{tpu_custom_call.1} parent=27 // pred_region
          %s275 = smul.u32 %s252, 16
          %v276 = vlaneseq
          %v277 = vshrl.u32 %v276, 7
          %v278 = vadd.s32 %v277, 8
          %v279 = vstv %s275
          %v280 = vadd.s32 %v279, %v277
          %v281 = vadd.s32 %v279, %v278
          %vm282 = vcmp.lt.s32.totalorder %v280, 16
          %vm283 = vcmp.lt.s32.totalorder %v281, 16
          %v284 = vsel %vm282, %v250, 0.0
          %v285 = vsel %vm283, %v251, 0.0
          %v286 = vld [vmem:[#allocation2] sm:$0xff]
          %v287 = vand.u32 2147483647, %v284
          %v288 = vand.u32 2147483647, %v285
          %v289 = vadd.f32 %v287, %v288
          %v290 = vadd.f32 %v286, %v289
          %291 = vst [vmem:[#allocation2] sm:$0xff] %v290
          %v292 = vld [vmem:[#allocation3] sm:$0xff]
          %v293 = vmul.f32 %v284, %v284
          %v294 = vmul.f32 %v285, %v285
          %v295 = vadd.f32 %v293, %v294
          %v296 = vadd.f32 %v292, %v295
          %297 = vst [vmem:[#allocation3] sm:$0xff] %v296
        $region48: #{tpu_custom_call.1} parent=27 // pred_fallthru
          _
        // Predicated region
        $region49: #{tpu_custom_call.1} parent=27 // pred_check
          %p298 = pneg %p240
        $region50: #{tpu_custom_call.1} parent=27 // pred_check_branch
          %300 = sbr.rel (%p298) target = $region52
        $region51: #{tpu_custom_call.1} parent=27 // pred_region
          %v301 = vld [vmem:[#allocation2] sm:$0xff]
          %v302 = vmul.f32 %v301, 0.3
          %v303 = vld [vmem:[#allocation3] sm:$0xff]
          %v304 = vmul.f32 %v303, 0.7
          %v305 = vadd.f32 %v302, %v304
          %v306 = vmul.f32 %v305, 0.00048828125
          %307 = vst [vmem:[%s231] sm:$0xff] %v306
        $region52: #{tpu_custom_call.1} parent=27 // pred_fallthru
          _
        %s308 = sand.u32 %s106, 1
        %s309 = scalar_lea.sflag [#allocation6], %s308
        %s310 = sand.u32 %s106, 1
        %s311 = smul.addr %s310, 8
        %s312 = scalar_lea.vmem [#allocation9], %s311
        // Predicated region
        $region53: #{tpu_custom_call.1} parent=27 // pred_check
          %p313 = pneg %p116
        $region54: #{tpu_custom_call.1} parent=27 // pred_check_branch
          %315 = sbr.rel (%p313) target = $region56
        $region55: #{tpu_custom_call.1} parent=27 // pred_region
          %s317 = ssub.s32 128, 128
          %318 = vsyncadd %s309, %s317
          %s319 = smul.addr %s26, 128
          %s320 = scalar_lea.hbm %s2, %s319
          %s322 = sshll.u32 %s312, 4
          %s323 = int_to_ptr.vmem [resolvable:$true] %s322
          %325 = dma.vmem_to_hbm [thread:$0]  %s323, 128, %s320, %s309
        $region56: #{tpu_custom_call.1} parent=27 // pred_fallthru
          _
      $region28: #{tpu_custom_call.1} parent=5 // pred_fallthru
        _
      %p326 = scmp.le.s32.totalorder 2, %s17
      // Predicated region
      $region57: #{tpu_custom_call.1} parent=5 // pred_check
        %p327 = pneg %p326
      $region58: #{tpu_custom_call.1} parent=5 // pred_check_branch
        %329 = sbr.rel (%p327) target = $region60
      $region59: #{tpu_custom_call.1} parent=5 // pred_region
        %s330 = ssub.s32 %s17, 2
        // Predicated region
        $region61: #{tpu_custom_call.1} parent=59 // pred_check
          %p331 = pneg %p122
        $region62: #{tpu_custom_call.1} parent=59 // pred_check_branch
          %333 = sbr.rel (%p331) target = $region64
        $region63: #{tpu_custom_call.1} parent=59 // pred_region
          %s334 = sand.u32 %s107, 1
          %s335 = scalar_lea.sflag [#allocation6], %s334
          %s336 = sand.u32 %s107, 1
          %s337 = smul.addr %s336, 8
          %s338 = scalar_lea.vmem [#allocation9], %s337
          %339 = dma.done %s335, 128
        $region64: #{tpu_custom_call.1} parent=59 // pred_fallthru
          _
      $region60: #{tpu_custom_call.1} parent=5 // pred_fallthru
        _
    $region6: #{tpu_custom_call.1} parent=1 // loop_footer
      %s21 = sadd.s32 1, %s17
    $region7: #{tpu_custom_call.1} parent=1 // loop_footer_branch
      %16 = sbr.rel target = $region3
    $region8: #{tpu_custom_call.1} parent=1 // loop_exit
      _
    %340 = vsyncpa [#allocation5], 1
    %s341 = scalar_lea.sflag [#allocation5], 1
    %342 = vsyncpa %s341, 1
    %343 = vsyncpa [#allocation8], 1
    %s344 = scalar_lea.sflag [#allocation8], 1
    %345 = vsyncpa %s344, 1
    %346 = vsyncpa [#allocation6], 1
    %s347 = scalar_lea.sflag [#allocation6], 1
    %348 = vsyncpa %s347, 1

</llo_original>
